<compile_context>
chip_gen: v7x
topology: tpu7x:2x2x1
jax: 0.10.0
libtpu: 0.0.40
codegen_flags: <defaults>
</compile_context>

<pallas_src>
import jax
import jax.numpy as jnp
from jax.experimental import pallas as pl
from jax.experimental.pallas import tpu as pltpu


def _round_up(a, b):
    return (a + b - 1) // b * b


def _attention_block_kernel(xT_ref, w1_ref, b1_ref, w2_ref, b2_ref, o_ref):
    # xT_ref: (D_in, TM) VMEM  -- feature rows, lane-dense over the M axis
    # w1_ref: (D_in, E) SMEM   b1_ref: (E,) SMEM
    # w2_ref: (E,)     SMEM    b2_ref: (1,) SMEM
    # o_ref : (1, TM)  VMEM    -- lane-dense output slab
    d_in = xT_ref.shape[0]
    e_dim = b1_ref.shape[0]
    tm = o_ref.shape[1]

    # Load each lane-dense feature row of x once; reuse across all E hidden units.
    x_rows = [xT_ref[pl.ds(d, 1), :] for d in range(d_in)]  # each (1, TM), f32

    # scores = tanh(x @ W1 + b1) @ W2 + b2, computed as scalar*vector FMAs on
    # the VPU (MXU would run at ~3% utilization for K=4 / N=1 contractions).
    s = jnp.full((1, tm), b2_ref[0], dtype=jnp.float32)
    for e in range(e_dim):
        acc = jnp.full((1, tm), b1_ref[e], dtype=jnp.float32)
        for d in range(d_in):
            acc = acc + w1_ref[d, e] * x_rows[d]
        h = jnp.tanh(acc)                      # EUP
        s = s + w2_ref[e] * h                  # VPU FMA

    # Softmax over the original trailing axis (size 1): stable form collapses to
    # exp(s - max) / sum == exp(s - s) / exp(s - s).  Kept for exact parity
    # (constant 1.0 for finite scores, NaN-propagating otherwise).
    e_s = jnp.exp(s - s)
    o_ref[...] = (e_s / e_s).astype(o_ref.dtype)


def simple_attention_block(x, w1, b1, w2, b2, *, tm_target=8192):
    """x: (B, N, D_in); w1: (D_in, E); b1: (E,); w2: (E, 1); b2: (1,).

    Returns softmax scores of shape (B, N, 1) (== nn.Softmax(dim=-1) of the
    fused Linear->Tanh->Linear scores).
    """
    B, N, D_in = x.shape
    E = w1.shape[1]
    M = B * N

    # Tile size: multiple of 128 lanes, capped by tm_target (tiles this small
    # easily fit double-buffered in VMEM on v5e/v6e/v7x).
    M_pad = _round_up(M, 128)
    TM = min(tm_target, M_pad)
    M_pad = _round_up(M_pad, TM)
    grid = (M_pad // TM,)

    # Lane-dense repack: rows (M) on lanes, the tiny feature dim on sublanes.
    xT = x.reshape(M, D_in).T                                   # (D_in, M)
    xT = jnp.pad(xT, ((0, 0), (0, M_pad - M)))                  # (D_in, M_pad)

    w2_flat = w2.reshape(E)
    b2_flat = b2.reshape(1)

    cost = pl.CostEstimate(
        flops=int(2 * M * (D_in * E + E)),
        transcendentals=int(M * (E + 1)),
        bytes_accessed=int(M * D_in * 4 + M * 4 + (D_in * E + 2 * E + 1) * 4),
    )

    out = pl.pallas_call(
        _attention_block_kernel,
        out_shape=jax.ShapeDtypeStruct((1, M_pad), x.dtype),
        grid_spec=pltpu.PrefetchScalarGridSpec(
            num_scalar_prefetch=0,
            grid=grid,
            in_specs=[
                # x^T: tiled over M, pipelined HBM->VMEM.
                pl.BlockSpec((D_in, TM), lambda i: (0, i)),
                # Tiny weights / biases live in SMEM as scalars.
                pl.BlockSpec(memory_space=pltpu.MemorySpace.SMEM),
                pl.BlockSpec(memory_space=pltpu.MemorySpace.SMEM),
                pl.BlockSpec(memory_space=pltpu.MemorySpace.SMEM),
                pl.BlockSpec(memory_space=pltpu.MemorySpace.SMEM),
            ],
            out_specs=pl.BlockSpec((1, TM), lambda i: (0, i)),
        ),
        compiler_params=pltpu.CompilerParams(
            dimension_semantics=("parallel",),
        ),
        cost_estimate=cost,
    )(xT, w1, b1, w2_flat, b2_flat)

    return out[0, :M].reshape(B, N, 1)


def _reference(x, w1, b1, w2, b2):
    h = jnp.tanh(jnp.einsum("bnd,de->bne", x, w1) + b1)
    s = jnp.einsum("bne,eo->bno", h, w2) + b2
    return jax.nn.softmax(s, axis=-1)


if __name__ == "__main__":
    # Small shapes consistent with the module: batch=2, seq=8, input_dim=4, embed_dim=8.
    B, N, D_in, E = 2, 8, 4, 8

    key = jax.random.PRNGKey(0)
    kx, kw1, kb1, kw2, kb2 = jax.random.split(key, 5)

    x = jax.random.normal(kx, (B, N, D_in), dtype=jnp.float32)

    # Deterministic init mimicking nn.Linear's U(-1/sqrt(fan_in), 1/sqrt(fan_in)).
    bound1 = 1.0 / jnp.sqrt(jnp.float32(D_in))
    bound2 = 1.0 / jnp.sqrt(jnp.float32(E))
    # Stored transposed relative to PyTorch (so forward is x @ W).
    w1 = jax.random.uniform(kw1, (D_in, E), jnp.float32, -bound1, bound1)
    b1 = jax.random.uniform(kb1, (E,), jnp.float32, -bound1, bound1)
    w2 = jax.random.uniform(kw2, (E, 1), jnp.float32, -bound2, bound2)
    b2 = jax.random.uniform(kb2, (1,), jnp.float32, -bound2, bound2)

    out = simple_attention_block(x, w1, b1, w2, b2)
    out = jax.block_until_ready(out)
    ref = _reference(x, w1, b1, w2, b2)
    assert out.shape == (B, N, 1), out.shape
    assert jnp.allclose(out, ref, atol=1e-5, rtol=1e-5), "mismatch vs reference"

    # Second run with M > TM to exercise the multi-tile "parallel" grid + padding path.
    B2, N2 = 3, 200
    x2 = jax.random.normal(jax.random.PRNGKey(1), (B2, N2, D_in), dtype=jnp.float32)
    out2 = simple_attention_block(x2, w1, b1, w2, b2, tm_target=256)
    out2 = jax.block_until_ready(out2)
    ref2 = _reference(x2, w1, b1, w2, b2)
    assert out2.shape == (B2, N2, 1), out2.shape
    assert jnp.allclose(out2, ref2, atol=1e-5, rtol=1e-5), "mismatch vs reference (tiled)"

    print("KERNEL_OK")
</pallas_src>

<mosaic_0001>
module attributes {stable_mosaic.version = 11 : i64} {
  func.func @_attention_block_kernel(%arg0: i32, %arg1: memref<4x128xf32, #tpu.memory_space<vmem>>, %arg2: memref<4x8xf32, #tpu.memory_space<smem>>, %arg3: memref<8xf32, #tpu.memory_space<smem>>, %arg4: memref<8xf32, #tpu.memory_space<smem>>, %arg5: memref<1xf32, #tpu.memory_space<smem>>, %arg6: memref<1x128xf32, #tpu.memory_space<vmem>>) attributes {dimension_semantics = [#tpu.dimension_semantics<parallel>], iteration_bounds = array<i64: 1>, scalar_prefetch = 0 : i64, scratch_operands = 0 : i64, tpu.core_type = #tpu.core_type<tc>, window_params = [{transform_indices = @transform_0, window_bounds = array<i64: 4, 128>}, {transform_indices = @transform_1, window_bounds = array<i64: 4, 8>}, {transform_indices = @transform_2, window_bounds = array<i64: 8>}, {transform_indices = @transform_3, window_bounds = array<i64: 8>}, {transform_indices = @transform_4, window_bounds = array<i64: 1>}, {transform_indices = @transform_5, window_bounds = array<i64: 1, 128>}]} {
    %c0 = arith.constant 0 : index
    %c0_0 = arith.constant 0 : index
    %0 = vector.load %arg1[%c0, %c0_0] : memref<4x128xf32, #tpu.memory_space<vmem>>, vector<1x128xf32>
    %c1 = arith.constant 1 : index
    %c0_1 = arith.constant 0 : index
    %1 = vector.load %arg1[%c1, %c0_1] : memref<4x128xf32, #tpu.memory_space<vmem>>, vector<1x128xf32>
    %c2 = arith.constant 2 : index
    %c0_2 = arith.constant 0 : index
    %2 = vector.load %arg1[%c2, %c0_2] : memref<4x128xf32, #tpu.memory_space<vmem>>, vector<1x128xf32>
    %c3 = arith.constant 3 : index
    %c0_3 = arith.constant 0 : index
    %3 = vector.load %arg1[%c3, %c0_3] : memref<4x128xf32, #tpu.memory_space<vmem>>, vector<1x128xf32>
    %c0_4 = arith.constant 0 : index
    %4 = memref.load %arg5[%c0_4] : memref<1xf32, #tpu.memory_space<smem>>
    %5 = vector.broadcast %4 : f32 to vector<1x128xf32>
    %c0_5 = arith.constant 0 : index
    %6 = memref.load %arg3[%c0_5] : memref<8xf32, #tpu.memory_space<smem>>
    %7 = vector.broadcast %6 : f32 to vector<1x128xf32>
    %c0_6 = arith.constant 0 : index
    %c0_7 = arith.constant 0 : index
    %8 = memref.load %arg2[%c0_6, %c0_7] : memref<4x8xf32, #tpu.memory_space<smem>>
    %9 = vector.broadcast %8 : f32 to vector<1x128xf32>
    %10 = arith.mulf %9, %0 : vector<1x128xf32>
    %11 = arith.addf %7, %10 : vector<1x128xf32>
    %c1_8 = arith.constant 1 : index
    %c0_9 = arith.constant 0 : index
    %12 = memref.load %arg2[%c1_8, %c0_9] : memref<4x8xf32, #tpu.memory_space<smem>>
    %13 = vector.broadcast %12 : f32 to vector<1x128xf32>
    %14 = arith.mulf %13, %1 : vector<1x128xf32>
    %15 = arith.addf %11, %14 : vector<1x128xf32>
    %c2_10 = arith.constant 2 : index
    %c0_11 = arith.constant 0 : index
    %16 = memref.load %arg2[%c2_10, %c0_11] : memref<4x8xf32, #tpu.memory_space<smem>>
    %17 = vector.broadcast %16 : f32 to vector<1x128xf32>
    %18 = arith.mulf %17, %2 : vector<1x128xf32>
    %19 = arith.addf %15, %18 : vector<1x128xf32>
    %c3_12 = arith.constant 3 : index
    %c0_13 = arith.constant 0 : index
    %20 = memref.load %arg2[%c3_12, %c0_13] : memref<4x8xf32, #tpu.memory_space<smem>>
    %21 = vector.broadcast %20 : f32 to vector<1x128xf32>
    %22 = arith.mulf %21, %3 : vector<1x128xf32>
    %23 = arith.addf %19, %22 : vector<1x128xf32>
    %24 = math.tanh %23 : vector<1x128xf32>
    %c0_14 = arith.constant 0 : index
    %25 = memref.load %arg4[%c0_14] : memref<8xf32, #tpu.memory_space<smem>>
    %26 = vector.broadcast %25 : f32 to vector<1x128xf32>
    %27 = arith.mulf %26, %24 : vector<1x128xf32>
    %28 = arith.addf %5, %27 : vector<1x128xf32>
    %c1_15 = arith.constant 1 : index
    %29 = memref.load %arg3[%c1_15] : memref<8xf32, #tpu.memory_space<smem>>
    %30 = vector.broadcast %29 : f32 to vector<1x128xf32>
    %c0_16 = arith.constant 0 : index
    %c1_17 = arith.constant 1 : index
    %31 = memref.load %arg2[%c0_16, %c1_17] : memref<4x8xf32, #tpu.memory_space<smem>>
    %32 = vector.broadcast %31 : f32 to vector<1x128xf32>
    %33 = arith.mulf %32, %0 : vector<1x128xf32>
    %34 = arith.addf %30, %33 : vector<1x128xf32>
    %c1_18 = arith.constant 1 : index
    %c1_19 = arith.constant 1 : index
    %35 = memref.load %arg2[%c1_18, %c1_19] : memref<4x8xf32, #tpu.memory_space<smem>>
    %36 = vector.broadcast %35 : f32 to vector<1x128xf32>
    %37 = arith.mulf %36, %1 : vector<1x128xf32>
    %38 = arith.addf %34, %37 : vector<1x128xf32>
    %c2_20 = arith.constant 2 : index
    %c1_21 = arith.constant 1 : index
    %39 = memref.load %arg2[%c2_20, %c1_21] : memref<4x8xf32, #tpu.memory_space<smem>>
    %40 = vector.broadcast %39 : f32 to vector<1x128xf32>
    %41 = arith.mulf %40, %2 : vector<1x128xf32>
    %42 = arith.addf %38, %41 : vector<1x128xf32>
    %c3_22 = arith.constant 3 : index
    %c1_23 = arith.constant 1 : index
    %43 = memref.load %arg2[%c3_22, %c1_23] : memref<4x8xf32, #tpu.memory_space<smem>>
    %44 = vector.broadcast %43 : f32 to vector<1x128xf32>
    %45 = arith.mulf %44, %3 : vector<1x128xf32>
    %46 = arith.addf %42, %45 : vector<1x128xf32>
    %47 = math.tanh %46 : vector<1x128xf32>
    %c1_24 = arith.constant 1 : index
    %48 = memref.load %arg4[%c1_24] : memref<8xf32, #tpu.memory_space<smem>>
    %49 = vector.broadcast %48 : f32 to vector<1x128xf32>
    %50 = arith.mulf %49, %47 : vector<1x128xf32>
    %51 = arith.addf %28, %50 : vector<1x128xf32>
    %c2_25 = arith.constant 2 : index
    %52 = memref.load %arg3[%c2_25] : memref<8xf32, #tpu.memory_space<smem>>
    %53 = vector.broadcast %52 : f32 to vector<1x128xf32>
    %c0_26 = arith.constant 0 : index
    %c2_27 = arith.constant 2 : index
    %54 = memref.load %arg2[%c0_26, %c2_27] : memref<4x8xf32, #tpu.memory_space<smem>>
    %55 = vector.broadcast %54 : f32 to vector<1x128xf32>
    %56 = arith.mulf %55, %0 : vector<1x128xf32>
    %57 = arith.addf %53, %56 : vector<1x128xf32>
    %c1_28 = arith.constant 1 : index
    %c2_29 = arith.constant 2 : index
    %58 = memref.load %arg2[%c1_28, %c2_29] : memref<4x8xf32, #tpu.memory_space<smem>>
    %59 = vector.broadcast %58 : f32 to vector<1x128xf32>
    %60 = arith.mulf %59, %1 : vector<1x128xf32>
    %61 = arith.addf %57, %60 : vector<1x128xf32>
    %c2_30 = arith.constant 2 : index
    %c2_31 = arith.constant 2 : index
    %62 = memref.load %arg2[%c2_30, %c2_31] : memref<4x8xf32, #tpu.memory_space<smem>>
    %63 = vector.broadcast %62 : f32 to vector<1x128xf32>
    %64 = arith.mulf %63, %2 : vector<1x128xf32>
    %65 = arith.addf %61, %64 : vector<1x128xf32>
    %c3_32 = arith.constant 3 : index
    %c2_33 = arith.constant 2 : index
    %66 = memref.load %arg2[%c3_32, %c2_33] : memref<4x8xf32, #tpu.memory_space<smem>>
    %67 = vector.broadcast %66 : f32 to vector<1x128xf32>
    %68 = arith.mulf %67, %3 : vector<1x128xf32>
    %69 = arith.addf %65, %68 : vector<1x128xf32>
    %70 = math.tanh %69 : vector<1x128xf32>
    %c2_34 = arith.constant 2 : index
    %71 = memref.load %arg4[%c2_34] : memref<8xf32, #tpu.memory_space<smem>>
    %72 = vector.broadcast %71 : f32 to vector<1x128xf32>
    %73 = arith.mulf %72, %70 : vector<1x128xf32>
    %74 = arith.addf %51, %73 : vector<1x128xf32>
    %c3_35 = arith.constant 3 : index
    %75 = memref.load %arg3[%c3_35] : memref<8xf32, #tpu.memory_space<smem>>
    %76 = vector.broadcast %75 : f32 to vector<1x128xf32>
    %c0_36 = arith.constant 0 : index
    %c3_37 = arith.constant 3 : index
    %77 = memref.load %arg2[%c0_36, %c3_37] : memref<4x8xf32, #tpu.memory_space<smem>>
    %78 = vector.broadcast %77 : f32 to vector<1x128xf32>
    %79 = arith.mulf %78, %0 : vector<1x128xf32>
    %80 = arith.addf %76, %79 : vector<1x128xf32>
    %c1_38 = arith.constant 1 : index
    %c3_39 = arith.constant 3 : index
    %81 = memref.load %arg2[%c1_38, %c3_39] : memref<4x8xf32, #tpu.memory_space<smem>>
    %82 = vector.broadcast %81 : f32 to vector<1x128xf32>
    %83 = arith.mulf %82, %1 : vector<1x128xf32>
    %84 = arith.addf %80, %83 : vector<1x128xf32>
    %c2_40 = arith.constant 2 : index
    %c3_41 = arith.constant 3 : index
    %85 = memref.load %arg2[%c2_40, %c3_41] : memref<4x8xf32, #tpu.memory_space<smem>>
    %86 = vector.broadcast %85 : f32 to vector<1x128xf32>
    %87 = arith.mulf %86, %2 : vector<1x128xf32>
    %88 = arith.addf %84, %87 : vector<1x128xf32>
    %c3_42 = arith.constant 3 : index
    %c3_43 = arith.constant 3 : index
    %89 = memref.load %arg2[%c3_42, %c3_43] : memref<4x8xf32, #tpu.memory_space<smem>>
    %90 = vector.broadcast %89 : f32 to vector<1x128xf32>
    %91 = arith.mulf %90, %3 : vector<1x128xf32>
    %92 = arith.addf %88, %91 : vector<1x128xf32>
    %93 = math.tanh %92 : vector<1x128xf32>
    %c3_44 = arith.constant 3 : index
    %94 = memref.load %arg4[%c3_44] : memref<8xf32, #tpu.memory_space<smem>>
    %95 = vector.broadcast %94 : f32 to vector<1x128xf32>
    %96 = arith.mulf %95, %93 : vector<1x128xf32>
    %97 = arith.addf %74, %96 : vector<1x128xf32>
    %c4 = arith.constant 4 : index
    %98 = memref.load %arg3[%c4] : memref<8xf32, #tpu.memory_space<smem>>
    %99 = vector.broadcast %98 : f32 to vector<1x128xf32>
    %c0_45 = arith.constant 0 : index
    %c4_46 = arith.constant 4 : index
    %100 = memref.load %arg2[%c0_45, %c4_46] : memref<4x8xf32, #tpu.memory_space<smem>>
    %101 = vector.broadcast %100 : f32 to vector<1x128xf32>
    %102 = arith.mulf %101, %0 : vector<1x128xf32>
    %103 = arith.addf %99, %102 : vector<1x128xf32>
    %c1_47 = arith.constant 1 : index
    %c4_48 = arith.constant 4 : index
    %104 = memref.load %arg2[%c1_47, %c4_48] : memref<4x8xf32, #tpu.memory_space<smem>>
    %105 = vector.broadcast %104 : f32 to vector<1x128xf32>
    %106 = arith.mulf %105, %1 : vector<1x128xf32>
    %107 = arith.addf %103, %106 : vector<1x128xf32>
    %c2_49 = arith.constant 2 : index
    %c4_50 = arith.constant 4 : index
    %108 = memref.load %arg2[%c2_49, %c4_50] : memref<4x8xf32, #tpu.memory_space<smem>>
    %109 = vector.broadcast %108 : f32 to vector<1x128xf32>
    %110 = arith.mulf %109, %2 : vector<1x128xf32>
    %111 = arith.addf %107, %110 : vector<1x128xf32>
    %c3_51 = arith.constant 3 : index
    %c4_52 = arith.constant 4 : index
    %112 = memref.load %arg2[%c3_51, %c4_52] : memref<4x8xf32, #tpu.memory_space<smem>>
    %113 = vector.broadcast %112 : f32 to vector<1x128xf32>
    %114 = arith.mulf %113, %3 : vector<1x128xf32>
    %115 = arith.addf %111, %114 : vector<1x128xf32>
    %116 = math.tanh %115 : vector<1x128xf32>
    %c4_53 = arith.constant 4 : index
    %117 = memref.load %arg4[%c4_53] : memref<8xf32, #tpu.memory_space<smem>>
    %118 = vector.broadcast %117 : f32 to vector<1x128xf32>
    %119 = arith.mulf %118, %116 : vector<1x128xf32>
    %120 = arith.addf %97, %119 : vector<1x128xf32>
    %c5 = arith.constant 5 : index
    %121 = memref.load %arg3[%c5] : memref<8xf32, #tpu.memory_space<smem>>
    %122 = vector.broadcast %121 : f32 to vector<1x128xf32>
    %c0_54 = arith.constant 0 : index
    %c5_55 = arith.constant 5 : index
    %123 = memref.load %arg2[%c0_54, %c5_55] : memref<4x8xf32, #tpu.memory_space<smem>>
    %124 = vector.broadcast %123 : f32 to vector<1x128xf32>
    %125 = arith.mulf %124, %0 : vector<1x128xf32>
    %126 = arith.addf %122, %125 : vector<1x128xf32>
    %c1_56 = arith.constant 1 : index
    %c5_57 = arith.constant 5 : index
    %127 = memref.load %arg2[%c1_56, %c5_57] : memref<4x8xf32, #tpu.memory_space<smem>>
    %128 = vector.broadcast %127 : f32 to vector<1x128xf32>
    %129 = arith.mulf %128, %1 : vector<1x128xf32>
    %130 = arith.addf %126, %129 : vector<1x128xf32>
    %c2_58 = arith.constant 2 : index
    %c5_59 = arith.constant 5 : index
    %131 = memref.load %arg2[%c2_58, %c5_59] : memref<4x8xf32, #tpu.memory_space<smem>>
    %132 = vector.broadcast %131 : f32 to vector<1x128xf32>
    %133 = arith.mulf %132, %2 : vector<1x128xf32>
    %134 = arith.addf %130, %133 : vector<1x128xf32>
    %c3_60 = arith.constant 3 : index
    %c5_61 = arith.constant 5 : index
    %135 = memref.load %arg2[%c3_60, %c5_61] : memref<4x8xf32, #tpu.memory_space<smem>>
    %136 = vector.broadcast %135 : f32 to vector<1x128xf32>
    %137 = arith.mulf %136, %3 : vector<1x128xf32>
    %138 = arith.addf %134, %137 : vector<1x128xf32>
    %139 = math.tanh %138 : vector<1x128xf32>
    %c5_62 = arith.constant 5 : index
    %140 = memref.load %arg4[%c5_62] : memref<8xf32, #tpu.memory_space<smem>>
    %141 = vector.broadcast %140 : f32 to vector<1x128xf32>
    %142 = arith.mulf %141, %139 : vector<1x128xf32>
    %143 = arith.addf %120, %142 : vector<1x128xf32>
    %c6 = arith.constant 6 : index
    %144 = memref.load %arg3[%c6] : memref<8xf32, #tpu.memory_space<smem>>
    %145 = vector.broadcast %144 : f32 to vector<1x128xf32>
    %c0_63 = arith.constant 0 : index
    %c6_64 = arith.constant 6 : index
    %146 = memref.load %arg2[%c0_63, %c6_64] : memref<4x8xf32, #tpu.memory_space<smem>>
    %147 = vector.broadcast %146 : f32 to vector<1x128xf32>
    %148 = arith.mulf %147, %0 : vector<1x128xf32>
    %149 = arith.addf %145, %148 : vector<1x128xf32>
    %c1_65 = arith.constant 1 : index
    %c6_66 = arith.constant 6 : index
    %150 = memref.load %arg2[%c1_65, %c6_66] : memref<4x8xf32, #tpu.memory_space<smem>>
    %151 = vector.broadcast %150 : f32 to vector<1x128xf32>
    %152 = arith.mulf %151, %1 : vector<1x128xf32>
    %153 = arith.addf %149, %152 : vector<1x128xf32>
    %c2_67 = arith.constant 2 : index
    %c6_68 = arith.constant 6 : index
    %154 = memref.load %arg2[%c2_67, %c6_68] : memref<4x8xf32, #tpu.memory_space<smem>>
    %155 = vector.broadcast %154 : f32 to vector<1x128xf32>
    %156 = arith.mulf %155, %2 : vector<1x128xf32>
    %157 = arith.addf %153, %156 : vector<1x128xf32>
    %c3_69 = arith.constant 3 : index
    %c6_70 = arith.constant 6 : index
    %158 = memref.load %arg2[%c3_69, %c6_70] : memref<4x8xf32, #tpu.memory_space<smem>>
    %159 = vector.broadcast %158 : f32 to vector<1x128xf32>
    %160 = arith.mulf %159, %3 : vector<1x128xf32>
    %161 = arith.addf %157, %160 : vector<1x128xf32>
    %162 = math.tanh %161 : vector<1x128xf32>
    %c6_71 = arith.constant 6 : index
    %163 = memref.load %arg4[%c6_71] : memref<8xf32, #tpu.memory_space<smem>>
    %164 = vector.broadcast %163 : f32 to vector<1x128xf32>
    %165 = arith.mulf %164, %162 : vector<1x128xf32>
    %166 = arith.addf %143, %165 : vector<1x128xf32>
    %c7 = arith.constant 7 : index
    %167 = memref.load %arg3[%c7] : memref<8xf32, #tpu.memory_space<smem>>
    %168 = vector.broadcast %167 : f32 to vector<1x128xf32>
    %c0_72 = arith.constant 0 : index
    %c7_73 = arith.constant 7 : index
    %169 = memref.load %arg2[%c0_72, %c7_73] : memref<4x8xf32, #tpu.memory_space<smem>>
    %170 = vector.broadcast %169 : f32 to vector<1x128xf32>
    %171 = arith.mulf %170, %0 : vector<1x128xf32>
    %172 = arith.addf %168, %171 : vector<1x128xf32>
    %c1_74 = arith.constant 1 : index
    %c7_75 = arith.constant 7 : index
    %173 = memref.load %arg2[%c1_74, %c7_75] : memref<4x8xf32, #tpu.memory_space<smem>>
    %174 = vector.broadcast %173 : f32 to vector<1x128xf32>
    %175 = arith.mulf %174, %1 : vector<1x128xf32>
    %176 = arith.addf %172, %175 : vector<1x128xf32>
    %c2_76 = arith.constant 2 : index
    %c7_77 = arith.constant 7 : index
    %177 = memref.load %arg2[%c2_76, %c7_77] : memref<4x8xf32, #tpu.memory_space<smem>>
    %178 = vector.broadcast %177 : f32 to vector<1x128xf32>
    %179 = arith.mulf %178, %2 : vector<1x128xf32>
    %180 = arith.addf %176, %179 : vector<1x128xf32>
    %c3_78 = arith.constant 3 : index
    %c7_79 = arith.constant 7 : index
    %181 = memref.load %arg2[%c3_78, %c7_79] : memref<4x8xf32, #tpu.memory_space<smem>>
    %182 = vector.broadcast %181 : f32 to vector<1x128xf32>
    %183 = arith.mulf %182, %3 : vector<1x128xf32>
    %184 = arith.addf %180, %183 : vector<1x128xf32>
    %185 = math.tanh %184 : vector<1x128xf32>
    %c7_80 = arith.constant 7 : index
    %186 = memref.load %arg4[%c7_80] : memref<8xf32, #tpu.memory_space<smem>>
    %187 = vector.broadcast %186 : f32 to vector<1x128xf32>
    %188 = arith.mulf %187, %185 : vector<1x128xf32>
    %189 = arith.addf %166, %188 : vector<1x128xf32>
    %190 = arith.subf %189, %189 : vector<1x128xf32>
    %191 = math.exp %190 : vector<1x128xf32>
    %192 = arith.divf %191, %191 : vector<1x128xf32>
    %c0_81 = arith.constant 0 : index
    %c0_82 = arith.constant 0 : index
    %193 = vector.load %arg6[%c0_81, %c0_82] : memref<1x128xf32, #tpu.memory_space<vmem>>, vector<1x128xf32>
    tpu.vector_store %arg6[%c0_81, %c0_82], %192 {strides = array<i32>} : memref<1x128xf32, #tpu.memory_space<vmem>>, vector<1x128xf32>,
    return
  }
  func.func @transform_0(%arg0: i32) -> (i32, i32) {
    %c0_i32 = arith.constant 0 : i32
    %c0_i32_0 = arith.constant 0 : i32
    return %c0_i32, %arg0 : i32, i32
  }
  func.func @transform_1(%arg0: i32) -> (i32, i32) {
    %c0_i32 = arith.constant 0 : i32
    %c0_i32_0 = arith.constant 0 : i32
    %c0_i32_1 = arith.constant 0 : i32
    return %c0_i32, %c0_i32_0 : i32, i32
  }
  func.func @transform_2(%arg0: i32) -> i32 {
    %c0_i32 = arith.constant 0 : i32
    %c0_i32_0 = arith.constant 0 : i32
    return %c0_i32 : i32
  }
  func.func @transform_3(%arg0: i32) -> i32 {
    %c0_i32 = arith.constant 0 : i32
    %c0_i32_0 = arith.constant 0 : i32
    return %c0_i32 : i32
  }
  func.func @transform_4(%arg0: i32) -> i32 {
    %c0_i32 = arith.constant 0 : i32
    %c0_i32_0 = arith.constant 0 : i32
    return %c0_i32 : i32
  }
  func.func @transform_5(%arg0: i32) -> (i32, i32) {
    %c0_i32 = arith.constant 0 : i32
    %c0_i32_0 = arith.constant 0 : i32
    return %c0_i32, %arg0 : i32, i32
  }
}

</mosaic_0001>

<llo_original>
// kernel: tpu_custom_call.1
$region0: #{tpu_custom_call.1}
  #allocation0 [shape = 'u32[]', space=smem, size = 0x4, offset = 0x4, fixed_abs, tag = 'smem constant byte address 0x4 - core index']
  #allocation1 [shape = 'u32[144,128]{1,0:T(1,128)}', space=vmem, size = 0x12000, scoped, tag = 'internal scratch']
  #allocation2 [shape = 'f32[1]{0:T(128)S(6)}', space=smem, size = 0x200, scoped, tag = 'scoped memory for tpu_custom_call.1']
  %s0 = inlined_call_operand.hbm [shape: f32[4,128], index: 0, kind: input, shape index: {}]
  %s1 = inlined_call_operand.vmem [shape: f32[4,8], index: 1, kind: input, shape index: {}]
  %s2 = inlined_call_operand.vmem [shape: f32[8], index: 2, kind: input, shape index: {}]
  %s3 = inlined_call_operand.vmem [shape: f32[8], index: 3, kind: input, shape index: {}]
  %s4 = inlined_call_operand.<no memory space> [shape: f32[1], index: 4, kind: input, shape index: {}]
  %s5 = inlined_call_operand.hbm [shape: f32[1,128], index: 5, kind: output, shape index: {}]
  %s6 = sld [smem:[#allocation0]]
  $region46: #{tpu_custom_call.1} parent=0
    _
  %s8 = ssub.s32 1, %s6
  %s9 = scalar_select 0, %s8, %s6
  %10 = sst [smem:[#allocation2]] %s4
  $region1: #{tpu_custom_call.1} parent=0
    #allocation3 [shape = 'u8[2048]{0}', space=vmem, size = 0x800, scoped, tag = 'input window, operand 0, single buffered']
    #allocation4 [shape = 's32[1]{0}', space=sflag, size = 0x4, scoped, tag = 'scoped memory for tpu_custom_call.1']
    #allocation5 [shape = 's32[1]{0}', space=sflag, size = 0x4, scoped, tag = 'scoped memory for tpu_custom_call.1']
    #allocation6 [shape = 's32[1]{0}', space=sflag, size = 0x4, scoped, tag = 'scoped memory for tpu_custom_call.1']
    #allocation7 [shape = 'u8[2048]{0}', space=smem, size = 0x800, scoped, tag = 'input window, operand 1, single buffered']
    #allocation8 [shape = 'u8[512]{0}', space=smem, size = 0x200, scoped, tag = 'input window, operand 2, single buffered']
    #allocation9 [shape = 's32[1]{0}', space=sflag, size = 0x4, scoped, tag = 'scoped memory for tpu_custom_call.1']
    #allocation10 [shape = 'u8[512]{0}', space=smem, size = 0x200, scoped, tag = 'input window, operand 3, single buffered']
    #allocation11 [shape = 'u8[512]{0}', space=vmem, size = 0x400, scoped, tag = 'output window, operand 0, single buffered']
    %11 = vsyncpa [#allocation4], 0
    %12 = vsyncpa [#allocation6], 0
    %13 = vsyncpa [#allocation9], 0
    %14 = vsyncpa [#allocation5], 0
    // Predicated region
    $region2: #{tpu_custom_call.1} parent=1 // pred_check
      _
    $region3: #{tpu_custom_call.1} parent=1 // pred_check_branch
      %16 = sbr.rel (0) target = $region5
    $region4: #{tpu_custom_call.1} parent=1 // pred_region
      %s18 = ssub.s32 64, 64
      %19 = vsyncadd [#allocation4], %s18
      %s21 = sshll.u32 [#allocation3], 4
      %s22 = int_to_ptr.vmem [resolvable:$true] %s21
      %24 = dma.hbm_to_vmem [thread:$0]  %s0, 64, %s22, [#allocation4]
    $region5: #{tpu_custom_call.1} parent=1 // pred_fallthru
      _
    // Predicated region
    $region6: #{tpu_custom_call.1} parent=1 // pred_check
      _
    $region7: #{tpu_custom_call.1} parent=1 // pred_check_branch
      %26 = sbr.rel (0) target = $region9
    $region8: #{tpu_custom_call.1} parent=1 // pred_region
      %s28 = ssub.s32 64, 64
      %29 = vsyncadd [#allocation6], %s28
      %s31 = sshll.u32 %s1, 4
      %s32 = int_to_ptr.vmem [resolvable:$true] %s31
      %34 = dma.vmem_to_smem %s32, 64, [#allocation7], [#allocation6]
    $region9: #{tpu_custom_call.1} parent=1 // pred_fallthru
      _
    // Predicated region
    $region10: #{tpu_custom_call.1} parent=1 // pred_check
      _
    $region11: #{tpu_custom_call.1} parent=1 // pred_check_branch
      %36 = sbr.rel (0) target = $region13
    $region12: #{tpu_custom_call.1} parent=1 // pred_region
      %s38 = ssub.s32 16, 16
      %39 = vsyncadd [#allocation9], %s38
      %s41 = sshll.u32 %s2, 4
      %s42 = int_to_ptr.vmem [resolvable:$true] %s41
      %44 = dma.vmem_to_smem %s42, 16, [#allocation8], [#allocation9]
    $region13: #{tpu_custom_call.1} parent=1 // pred_fallthru
      _
    // Predicated region
    $region14: #{tpu_custom_call.1} parent=1 // pred_check
      _
    $region15: #{tpu_custom_call.1} parent=1 // pred_check_branch
      %46 = sbr.rel (0) target = $region17
    $region16: #{tpu_custom_call.1} parent=1 // pred_region
      %s48 = ssub.s32 16, 16
      %49 = vsyncadd [#allocation9], %s48
      %s51 = sshll.u32 %s3, 4
      %s52 = int_to_ptr.vmem [resolvable:$true] %s51
      %54 = dma.vmem_to_smem %s52, 16, [#allocation10], [#allocation9]
    $region17: #{tpu_custom_call.1} parent=1 // pred_fallthru
      _
    // Predicated region
    $region18: #{tpu_custom_call.1} parent=1 // pred_check
      _
    $region19: #{tpu_custom_call.1} parent=1 // pred_check_branch
      %56 = sbr.rel (0) target = $region21
    $region20: #{tpu_custom_call.1} parent=1 // pred_region
      _
    $region21: #{tpu_custom_call.1} parent=1 // pred_fallthru
      _
    // Predicated region
    $region22: #{tpu_custom_call.1} parent=1 // pred_check
      _
    $region23: #{tpu_custom_call.1} parent=1 // pred_check_branch
      %58 = sbr.rel (0) target = $region25
    $region24: #{tpu_custom_call.1} parent=1 // pred_region
      %59 = dma.done [#allocation4], 64
    $region25: #{tpu_custom_call.1} parent=1 // pred_fallthru
      _
    // Predicated region
    $region26: #{tpu_custom_call.1} parent=1 // pred_check
      _
    $region27: #{tpu_custom_call.1} parent=1 // pred_check_branch
      %61 = sbr.rel (0) target = $region29
    $region28: #{tpu_custom_call.1} parent=1 // pred_region
      %62 = dma.done [#allocation6], 64
    $region29: #{tpu_custom_call.1} parent=1 // pred_fallthru
      _
    // Predicated region
    $region30: #{tpu_custom_call.1} parent=1 // pred_check
      _
    $region31: #{tpu_custom_call.1} parent=1 // pred_check_branch
      %64 = sbr.rel (0) target = $region33
    $region32: #{tpu_custom_call.1} parent=1 // pred_region
      %65 = dma.done [#allocation9], 16
    $region33: #{tpu_custom_call.1} parent=1 // pred_fallthru
      _
    // Predicated region
    $region34: #{tpu_custom_call.1} parent=1 // pred_check
      _
    $region35: #{tpu_custom_call.1} parent=1 // pred_check_branch
      %67 = sbr.rel (0) target = $region37
    $region36: #{tpu_custom_call.1} parent=1 // pred_region
      %68 = dma.done [#allocation9], 16
    $region37: #{tpu_custom_call.1} parent=1 // pred_fallthru
      _
    %69 = sfence
    %v70 = vld [vmem:[#allocation3] sm:$0x1]
    %v71 = vld [vmem:[#allocation3 + $0x1] sm:$0x1]
    %v72 = vld [vmem:[#allocation3 + $0x2] sm:$0x1]
    %v73 = vld [vmem:[#allocation3 + $0x3] sm:$0x1]
    %s74 = sld [smem:[#allocation2]]
    %v75 = vstv %s74
    %s76 = sld [smem:[#allocation8]]
    %v77 = vstv %s76
    %s78 = sld [smem:[#allocation7]]
    %v79 = vstv %s78
    %v80 = vmul.f32 %v79, %v70
    %v81 = vadd.f32 %v77, %v80
    %s82 = sld [smem:[#allocation7 + $0x80]]
    %v83 = vstv %s82
    %v84 = vmul.f32 %v83, %v71
    %v85 = vadd.f32 %v81, %v84
    %s86 = sld [smem:[#allocation7 + $0x100]]
    %v87 = vstv %s86
    %v88 = vmul.f32 %v87, %v72
    %v89 = vadd.f32 %v85, %v88
    %s90 = sld [smem:[#allocation7 + $0x180]]
    %v91 = vstv %s90
    %v92 = vmul.f32 %v91, %v73
    %v93 = vadd.f32 %v89, %v92
    %v94 = vtanh.pop %v93
    %s95 = sld [smem:[#allocation10]]
    %v96 = vstv %s95
    %v97 = vmul.f32 %v96, %v94
    %v98 = vadd.f32 %v75, %v97
    %s99 = sld [smem:[#allocation8 + $0x1]]
    %v100 = vstv %s99
    %s101 = sld [smem:[#allocation7 + $0x1]]
    %v102 = vstv %s101
    %v103 = vmul.f32 %v102, %v70
    %v104 = vadd.f32 %v100, %v103
    %s105 = sld [smem:[#allocation7 + $0x81]]
    %v106 = vstv %s105
    %v107 = vmul.f32 %v106, %v71
    %v108 = vadd.f32 %v104, %v107
    %s109 = sld [smem:[#allocation7 + $0x101]]
    %v110 = vstv %s109
    %v111 = vmul.f32 %v110, %v72
    %v112 = vadd.f32 %v108, %v111
    %s113 = sld [smem:[#allocation7 + $0x181]]
    %v114 = vstv %s113
    %v115 = vmul.f32 %v114, %v73
    %v116 = vadd.f32 %v112, %v115
    %v117 = vtanh.pop %v116
    %s118 = sld [smem:[#allocation10 + $0x1]]
    %v119 = vstv %s118
    %v120 = vmul.f32 %v119, %v117
    %v121 = vadd.f32 %v98, %v120
    %s122 = sld [smem:[#allocation8 + $0x2]]
    %v123 = vstv %s122
    %s124 = sld [smem:[#allocation7 + $0x2]]
    %v125 = vstv %s124
    %v126 = vmul.f32 %v125, %v70
    %v127 = vadd.f32 %v123, %v126
    %s128 = sld [smem:[#allocation7 + $0x82]]
    %v129 = vstv %s128
    %v130 = vmul.f32 %v129, %v71
    %v131 = vadd.f32 %v127, %v130
    %s132 = sld [smem:[#allocation7 + $0x102]]
    %v133 = vstv %s132
    %v134 = vmul.f32 %v133, %v72
    %v135 = vadd.f32 %v131, %v134
    %s136 = sld [smem:[#allocation7 + $0x182]]
    %v137 = vstv %s136
    %v138 = vmul.f32 %v137, %v73
    %v139 = vadd.f32 %v135, %v138
    %v140 = vtanh.pop %v139
    %s141 = sld [smem:[#allocation10 + $0x2]]
    %v142 = vstv %s141
    %v143 = vmul.f32 %v142, %v140
    %v144 = vadd.f32 %v121, %v143
    %s145 = sld [smem:[#allocation8 + $0x3]]
    %v146 = vstv %s145
    %s147 = sld [smem:[#allocation7 + $0x3]]
    %v148 = vstv %s147
    %v149 = vmul.f32 %v148, %v70
    %v150 = vadd.f32 %v146, %v149
    %s151 = sld [smem:[#allocation7 + $0x83]]
    %v152 = vstv %s151
    %v153 = vmul.f32 %v152, %v71
    %v154 = vadd.f32 %v150, %v153
    %s155 = sld [smem:[#allocation7 + $0x103]]
    %v156 = vstv %s155
    %v157 = vmul.f32 %v156, %v72
    %v158 = vadd.f32 %v154, %v157
    %s159 = sld [smem:[#allocation7 + $0x183]]
    %v160 = vstv %s159
    %v161 = vmul.f32 %v160, %v73
    %v162 = vadd.f32 %v158, %v161
    %v163 = vtanh.pop %v162
    %s164 = sld [smem:[#allocation10 + $0x3]]
    %v165 = vstv %s164
    %v166 = vmul.f32 %v165, %v163
    %v167 = vadd.f32 %v144, %v166
    %s168 = sld [smem:[#allocation8 + $0x4]]
    %v169 = vstv %s168
    %s170 = sld [smem:[#allocation7 + $0x4]]
    %v171 = vstv %s170
    %v172 = vmul.f32 %v171, %v70
    %v173 = vadd.f32 %v169, %v172
    %s174 = sld [smem:[#allocation7 + $0x84]]
    %v175 = vstv %s174
    %v176 = vmul.f32 %v175, %v71
    %v177 = vadd.f32 %v173, %v176
    %s178 = sld [smem:[#allocation7 + $0x104]]
    %v179 = vstv %s178
    %v180 = vmul.f32 %v179, %v72
    %v181 = vadd.f32 %v177, %v180
    %s182 = sld [smem:[#allocation7 + $0x184]]
    %v183 = vstv %s182
    %v184 = vmul.f32 %v183, %v73
    %v185 = vadd.f32 %v181, %v184
    %v186 = vtanh.pop %v185
    %s187 = sld [smem:[#allocation10 + $0x4]]
    %v188 = vstv %s187
    %v189 = vmul.f32 %v188, %v186
    %v190 = vadd.f32 %v167, %v189
    %s191 = sld [smem:[#allocation8 + $0x5]]
    %v192 = vstv %s191
    %s193 = sld [smem:[#allocation7 + $0x5]]
    %v194 = vstv %s193
    %v195 = vmul.f32 %v194, %v70
    %v196 = vadd.f32 %v192, %v195
    %s197 = sld [smem:[#allocation7 + $0x85]]
    %v198 = vstv %s197
    %v199 = vmul.f32 %v198, %v71
    %v200 = vadd.f32 %v196, %v199
    %s201 = sld [smem:[#allocation7 + $0x105]]
    %v202 = vstv %s201
    %v203 = vmul.f32 %v202, %v72
    %v204 = vadd.f32 %v200, %v203
    %s205 = sld [smem:[#allocation7 + $0x185]]
    %v206 = vstv %s205
    %v207 = vmul.f32 %v206, %v73
    %v208 = vadd.f32 %v204, %v207
    %v209 = vtanh.pop %v208
    %s210 = sld [smem:[#allocation10 + $0x5]]
    %v211 = vstv %s210
    %v212 = vmul.f32 %v211, %v209
    %v213 = vadd.f32 %v190, %v212
    %s214 = sld [smem:[#allocation8 + $0x6]]
    %v215 = vstv %s214
    %s216 = sld [smem:[#allocation7 + $0x6]]
    %v217 = vstv %s216
    %v218 = vmul.f32 %v217, %v70
    %v219 = vadd.f32 %v215, %v218
    %s220 = sld [smem:[#allocation7 + $0x86]]
    %v221 = vstv %s220
    %v222 = vmul.f32 %v221, %v71
    %v223 = vadd.f32 %v219, %v222
    %s224 = sld [smem:[#allocation7 + $0x106]]
    %v225 = vstv %s224
    %v226 = vmul.f32 %v225, %v72
    %v227 = vadd.f32 %v223, %v226
    %s228 = sld [smem:[#allocation7 + $0x186]]
    %v229 = vstv %s228
    %v230 = vmul.f32 %v229, %v73
    %v231 = vadd.f32 %v227, %v230
    %v232 = vtanh.pop %v231
    %s233 = sld [smem:[#allocation10 + $0x6]]
    %v234 = vstv %s233
    %v235 = vmul.f32 %v234, %v232
    %v236 = vadd.f32 %v213, %v235
    %s237 = sld [smem:[#allocation8 + $0x7]]
    %v238 = vstv %s237
    %s239 = sld [smem:[#allocation7 + $0x7]]
    %v240 = vstv %s239
    %v241 = vmul.f32 %v240, %v70
    %v242 = vadd.f32 %v238, %v241
    %s243 = sld [smem:[#allocation7 + $0x87]]
    %v244 = vstv %s243
    %v245 = vmul.f32 %v244, %v71
    %v246 = vadd.f32 %v242, %v245
    %s247 = sld [smem:[#allocation7 + $0x107]]
    %v248 = vstv %s247
    %v249 = vmul.f32 %v248, %v72
    %v250 = vadd.f32 %v246, %v249
    %s251 = sld [smem:[#allocation7 + $0x187]]
    %v252 = vstv %s251
    %v253 = vmul.f32 %v252, %v73
    %v254 = vadd.f32 %v250, %v253
    %v255 = vtanh.pop %v254
    %s256 = sld [smem:[#allocation10 + $0x7]]
    %v257 = vstv %s256
    %v258 = vmul.f32 %v257, %v255
    %v259 = vadd.f32 %v236, %v258
    %v260 = vsub.f32 %v259, %v259
    %v261 = vmul.f32 %v260, 1.442695
    %v262 = vpow.pop %v261
    %v263 = vrcp.pop %v262
    %v264 = vmul.f32 %v262, %v263
    %265 = vst [vmem:[#allocation11] sm:$0x1] %v264
    // Predicated region
    $region38: #{tpu_custom_call.1} parent=1 // pred_check
      _
    $region39: #{tpu_custom_call.1} parent=1 // pred_check_branch
      %267 = sbr.rel (0) target = $region41
    $region40: #{tpu_custom_call.1} parent=1 // pred_region
      %s269 = ssub.s32 16, 16
      %270 = vsyncadd [#allocation5], %s269
      %s272 = sshll.u32 [#allocation11], 4
      %s273 = int_to_ptr.vmem [resolvable:$true] %s272
      %275 = dma.vmem_to_hbm [thread:$0]  %s273, 16, %s5, [#allocation5]
    $region41: #{tpu_custom_call.1} parent=1 // pred_fallthru
      _
    // Predicated region
    $region42: #{tpu_custom_call.1} parent=1 // pred_check
      _
    $region43: #{tpu_custom_call.1} parent=1 // pred_check_branch
      %277 = sbr.rel (0) target = $region45
    $region44: #{tpu_custom_call.1} parent=1 // pred_region
      %278 = dma.done [#allocation5], 16
    $region45: #{tpu_custom_call.1} parent=1 // pred_fallthru
      _
    %279 = vsyncpa [#allocation4], 1
    %280 = vsyncpa [#allocation5], 1
    %281 = vsyncpa [#allocation6], 1
    %282 = vsyncpa [#allocation9], 1

</llo_original>
